<compile_context>
chip_gen: v5e
topology: v5e:2x2
jax: 0.10.0
libtpu: 0.0.40
codegen_flags: <defaults>
</compile_context>

<pallas_src>
import numpy as np

import jax
import jax.numpy as jnp
from jax import lax
from jax.experimental import pallas as pl
from jax.experimental.pallas import tpu as pltpu


# ----------------------------------------------------------------------------
# Fused kernel: conv3x3+ReLU -> conv3x3+ReLU -> maxpool2x2, B_blk images/step
# ----------------------------------------------------------------------------
def _down_conv_kernel(x_ref, t1_ref, b1_ref, t2_ref, b2_ref,
                      mtop_ref, mbot_ref, rse_ref, rso_ref, cse_ref, cso_ref,
                      bp_ref, pool_ref, y1pad_ref):
    """Refs (M = B_blk*H stacked rows, lane-dense W*C columns):

    x_ref    : (1, M+2, W*Cin)     stacked input, 1 zero row above/below
    t1_ref   : (3, W*Cin,  W*Cout) conv1 row-Toeplitz slabs (one per dy)
    b1_ref   : (1, W*Cout)         conv1 bias tiled per column
    t2_ref   : (3, W*Cout, W*Cout) conv2 row-Toeplitz slabs
    b2_ref   : (1, W*Cout)         conv2 bias tiled per column
    mtop_ref : (M, 1)              0 where the dy=0 tap crosses an image top
    mbot_ref : (M, 1)              0 where the dy=2 tap crosses an image bottom
    rse/rso  : (M//2, M)           pooled-row selectors (even / odd rows)
    cse/cso  : (W*Cout, (W//2)*Cout) pooled-column selectors (even / odd cols)
    bp_ref   : (1, M, W*Cout)      before_pool output (stacked)
    pool_ref : (1, M//2, (W//2)*Cout) pooled output (stacked)
    y1pad_ref: VMEM (M+2, W*Cout)  scratch: y1 with a 1-row zero halo
    """
    f32 = jnp.float32
    M = bp_ref.shape[1]

    mtop = mtop_ref[...]                       # (M, 1)
    mbot = mbot_ref[...]                       # (M, 1)

    # ---- conv1 + ReLU: 3 row-tap MXU matmuls (K = W*Cin, N = W*Cout) ----
    acc = jnp.dot(x_ref[0, 1:M + 1, :], t1_ref[1], preferred_element_type=f32)
    acc = acc + mtop * jnp.dot(x_ref[0, 0:M, :], t1_ref[0],
                               preferred_element_type=f32)
    acc = acc + mbot * jnp.dot(x_ref[0, 2:M + 2, :], t1_ref[2],
                               preferred_element_type=f32)
    y1 = jnp.maximum(acc + b1_ref[...], 0.0)                  # (M, W*Cout)

    # Stage y1 with a 1-row zero halo in VMEM (no HBM round trip).  Halo rows
    # are rewritten every step (cheap) — see header for why not pl.when(pid==0).
    zrow = jnp.zeros((1, y1pad_ref.shape[1]), f32)
    y1pad_ref[0:1, :] = zrow
    y1pad_ref[M + 1:M + 2, :] = zrow
    y1pad_ref[1:M + 1, :] = y1

    # ---- conv2 + ReLU: 3 row-tap MXU matmuls (K = N = W*Cout) ----
    acc = jnp.dot(y1pad_ref[1:M + 1, :], t2_ref[1], preferred_element_type=f32)
    acc = acc + mtop * jnp.dot(y1pad_ref[0:M, :], t2_ref[0],
                               preferred_element_type=f32)
    acc = acc + mbot * jnp.dot(y1pad_ref[2:M + 2, :], t2_ref[2],
                               preferred_element_type=f32)
    y2 = jnp.maximum(acc + b2_ref[...], 0.0)                  # (M, W*Cout)

    bp_ref[...] = y2[None].astype(bp_ref.dtype)               # full-lane store

    # ---- 2x2 max-pool (stride 2) via hoisted 0/1 selector matmuls + VPU max.
    # TODO(synk): at large row tiles, re-read y2 from bp_ref here to cap vregs.
    rm = jnp.maximum(
        jnp.dot(rse_ref[...], y2, preferred_element_type=f32),
        jnp.dot(rso_ref[...], y2, preferred_element_type=f32))   # (M/2, W*Cout)
    pooled = jnp.maximum(
        jnp.dot(rm, cse_ref[...], preferred_element_type=f32),
        jnp.dot(rm, cso_ref[...], preferred_element_type=f32))   # (M/2, Wh*Cout)
    pool_ref[...] = pooled[None].astype(pool_ref.dtype)


# ----------------------------------------------------------------------------
# Wrapper-side constant packing (done once at trace time, VMEM-resident)
# ----------------------------------------------------------------------------
def _row_toeplitz(w_hwio, width):
    """Per-dy Toeplitz slab (3, width*Cin, width*Cout) for a 3x3 conv with the
    horizontal zero padding folded in (output column j reads input columns
    j-1, j, j+1; out-of-range columns contribute implicit zeros)."""
    kH, kW, Cin, Cout = w_hwio.shape
    sel = np.zeros((kW, width, width), np.float32)      # static, built once
    for j in range(width):
        for dx in range(kW):
            w_in = j - 1 + dx
            if 0 <= w_in < width:
                sel[dx, w_in, j] = 1.0
    # T[dy, w_in*Cin+ci, j*Cout+co] = sum_dx sel[dx, w_in, j] * w[dy, dx, ci, co]
    t = jnp.einsum("xwj,yxio->ywijo", jnp.asarray(sel), w_hwio)
    return t.reshape(kH, width * Cin, width * Cout)


def _pool_selectors(M, W, Cout):
    """Constant 0/1 selectors for the 2x2 max-pool (hoisted out of the kernel)."""
    Wh = W // 2
    rse = np.zeros((M // 2, M), np.float32)
    rso = np.zeros((M // 2, M), np.float32)
    rse[np.arange(M // 2), 2 * np.arange(M // 2)] = 1.0
    rso[np.arange(M // 2), 2 * np.arange(M // 2) + 1] = 1.0
    cse = np.zeros((W * Cout, Wh * Cout), np.float32)
    cso = np.zeros((W * Cout, Wh * Cout), np.float32)
    eye = np.eye(Cout, dtype=np.float32)
    for j in range(Wh):
        cse[(2 * j) * Cout:(2 * j + 1) * Cout, j * Cout:(j + 1) * Cout] = eye
        cso[(2 * j + 1) * Cout:(2 * j + 2) * Cout, j * Cout:(j + 1) * Cout] = eye
    return map(jnp.asarray, (rse, rso, cse, cso))


def down_conv_fused(x_nhwc, w1, b1, w2, b2, *, block_rows_target=256):
    """x_nhwc: (N,H,W,Cin); w: HWIO (3,3,Ci,Co).  Returns stacked lane-dense
    outputs before_pool (nb, B_blk*H, W*Cout) and pooled (nb, B_blk*H//2,
    (W//2)*Cout) with nb = N // B_blk."""
    N, H, W, Cin = x_nhwc.shape
    Cout = w1.shape[-1]
    Hh, Wh = H // 2, W // 2

    # Batch-block size: stack B_blk images along the matmul M axis, targeting
    # M = B_blk*H in the ~128-256 range (MXU depth); B_blk must divide N.
    b_blk = 1
    for d in range(1, N + 1):
        if N % d == 0 and d * H <= max(H, block_rows_target):
            b_blk = d
    nb = N // b_blk
    M = b_blk * H

    # Stacked input with only a 2-row vertical pad per batch block; horizontal
    # padding lives inside the Toeplitz slabs (no HBM-side width pad).
    x_st = jnp.pad(x_nhwc.reshape(nb, M, W * Cin), ((0, 0), (1, 1), (0, 0)))

    # Pre-packed, VMEM-resident constants.
    t1 = _row_toeplitz(w1, W)                       # (3, W*Cin,  W*Cout)
    t2 = _row_toeplitz(w2, W)                       # (3, W*Cout, W*Cout)
    b1_row = jnp.tile(b1, W).reshape(1, W * Cout)
    b2_row = jnp.tile(b2, W).reshape(1, W * Cout)
    q = np.arange(M)
    mtop = jnp.asarray((q % H != 0).astype(np.float32).reshape(M, 1))
    mbot = jnp.asarray((q % H != H - 1).astype(np.float32).reshape(M, 1))
    rse, rso, cse, cso = _pool_selectors(M, W, Cout)

    bp, pooled = pl.pallas_call(
        _down_conv_kernel,
        out_shape=(
            jax.ShapeDtypeStruct((nb, M, W * Cout), x_nhwc.dtype),
            jax.ShapeDtypeStruct((nb, M // 2, Wh * Cout), x_nhwc.dtype),
        ),
        grid=(nb,),
        in_specs=[
            pl.BlockSpec((1, M + 2, W * Cin), lambda n: (n, 0, 0)),
            pl.BlockSpec((3, W * Cin, W * Cout), lambda n: (0, 0, 0)),
            pl.BlockSpec((1, W * Cout), lambda n: (0, 0)),
            pl.BlockSpec((3, W * Cout, W * Cout), lambda n: (0, 0, 0)),
            pl.BlockSpec((1, W * Cout), lambda n: (0, 0)),
            pl.BlockSpec((M, 1), lambda n: (0, 0)),
            pl.BlockSpec((M, 1), lambda n: (0, 0)),
            pl.BlockSpec((M // 2, M), lambda n: (0, 0)),
            pl.BlockSpec((M // 2, M), lambda n: (0, 0)),
            pl.BlockSpec((W * Cout, Wh * Cout), lambda n: (0, 0)),
            pl.BlockSpec((W * Cout, Wh * Cout), lambda n: (0, 0)),
        ],
        out_specs=(
            pl.BlockSpec((1, M, W * Cout), lambda n: (n, 0, 0)),
            pl.BlockSpec((1, M // 2, Wh * Cout), lambda n: (n, 0, 0)),
        ),
        scratch_shapes=[pltpu.VMEM((M + 2, W * Cout), jnp.float32)],
        compiler_params=pltpu.CompilerParams(
            dimension_semantics=("parallel",),
            # Re-derive for v7x (64 MiB/TC) when shapes grow; tiny here.
            vmem_limit_bytes=32 * 1024 * 1024),
    )(x_st, t1, b1_row, t2, b2_row, mtop, mbot, rse, rso, cse, cso)
    return bp, pooled


@jax.jit
def down_conv_forward(x_nchw, w1, b1, w2, b2):
    """Forward of _DownConv(in_ch, out_ch, pooling=True, use_bn=False).

    NCHW in/out to match PyTorch; compute runs lane-dense stacked-NHWC inside
    the fused kernel.  Returns (pooled, before_pool)."""
    N, Cin, H, W = x_nchw.shape
    Cout = w1.shape[-1]
    assert H % 2 == 0 and W % 2 == 0, "2x2 pool path assumes even H, W"
    x = jnp.transpose(x_nchw, (0, 2, 3, 1))                  # NCHW -> NHWC
    bp, pooled = down_conv_fused(x, w1, b1, w2, b2)
    before_pool = jnp.transpose(bp.reshape(N, H, W, Cout), (0, 3, 1, 2))
    pooled = jnp.transpose(pooled.reshape(N, H // 2, W // 2, Cout), (0, 3, 1, 2))
    return pooled, before_pool


# ----------------------------------------------------------------------------
# Deterministic parameter init (matches nn.Conv2d shapes; kaiming-uniform-like)
# ----------------------------------------------------------------------------
def init_params(key, in_channels, out_channels):
    k1, k2, k3, k4 = jax.random.split(key, 4)
    bound1 = 1.0 / jnp.sqrt(in_channels * 3 * 3)
    bound2 = 1.0 / jnp.sqrt(out_channels * 3 * 3)
    # HWIO layout (PyTorch stores OIHW; same math, different layout).
    w1 = jax.random.uniform(k1, (3, 3, in_channels, out_channels),
                            minval=-bound1, maxval=bound1, dtype=jnp.float32)
    b1 = jax.random.uniform(k2, (out_channels,),
                            minval=-bound1, maxval=bound1, dtype=jnp.float32)
    w2 = jax.random.uniform(k3, (3, 3, out_channels, out_channels),
                            minval=-bound2, maxval=bound2, dtype=jnp.float32)
    b2 = jax.random.uniform(k4, (out_channels,),
                            minval=-bound2, maxval=bound2, dtype=jnp.float32)
    return w1, b1, w2, b2


# ----------------------------------------------------------------------------
# Pure-JAX reference for correctness check
# ----------------------------------------------------------------------------
def _ref_forward(x_nchw, w1, b1, w2, b2):
    x = jnp.transpose(x_nchw, (0, 2, 3, 1))
    dn = ("NHWC", "HWIO", "NHWC")

    def conv_relu(x, w, b):
        y = lax.conv_general_dilated(x, w, (1, 1), ((1, 1), (1, 1)),
                                     dimension_numbers=dn)
        return jnp.maximum(y + b[None, None, None, :], 0.0)

    y = conv_relu(conv_relu(x, w1, b1), w2, b2)
    p = lax.reduce_window(y, -jnp.inf, lax.max,
                          (1, 2, 2, 1), (1, 2, 2, 1), "VALID")
    return jnp.transpose(p, (0, 3, 1, 2)), jnp.transpose(y, (0, 3, 1, 2))


if __name__ == "__main__":
    key = jax.random.PRNGKey(0)
    k_x, k_p = jax.random.split(key)

    N, Cin, Cout, H, W = 2, 4, 8, 16, 16
    x = jax.random.normal(k_x, (N, Cin, H, W), dtype=jnp.float32)
    w1, b1, w2, b2 = init_params(k_p, Cin, Cout)

    pooled, before_pool = down_conv_forward(x, w1, b1, w2, b2)
    jax.block_until_ready((pooled, before_pool))

    assert pooled.shape == (N, Cout, H // 2, W // 2)
    assert before_pool.shape == (N, Cout, H, W)

    ref_pooled, ref_before = _ref_forward(x, w1, b1, w2, b2)
    assert jnp.allclose(before_pool, ref_before, atol=1e-4, rtol=1e-4)
    assert jnp.allclose(pooled, ref_pooled, atol=1e-4, rtol=1e-4)

    print("KERNEL_OK")
</pallas_src>

<mosaic_0001>
module attributes {stable_mosaic.version = 11 : i64} {
  func.func @_down_conv_kernel(%arg0: i32, %arg1: memref<1x34x64xf32, #tpu.memory_space<vmem>>, %arg2: memref<3x64x128xf32, #tpu.memory_space<vmem>>, %arg3: memref<1x128xf32, #tpu.memory_space<vmem>>, %arg4: memref<3x128x128xf32, #tpu.memory_space<vmem>>, %arg5: memref<1x128xf32, #tpu.memory_space<vmem>>, %arg6: memref<32x1xf32, #tpu.memory_space<vmem>>, %arg7: memref<32x1xf32, #tpu.memory_space<vmem>>, %arg8: memref<16x32xf32, #tpu.memory_space<vmem>>, %arg9: memref<16x32xf32, #tpu.memory_space<vmem>>, %arg10: memref<128x64xf32, #tpu.memory_space<vmem>>, %arg11: memref<128x64xf32, #tpu.memory_space<vmem>>, %arg12: memref<1x32x128xf32, #tpu.memory_space<vmem>>, %arg13: memref<1x16x64xf32, #tpu.memory_space<vmem>>, %arg14: memref<34x128xf32, #tpu.memory_space<vmem>>) attributes {dimension_semantics = [#tpu.dimension_semantics<parallel>], iteration_bounds = array<i64: 1>, scalar_prefetch = 0 : i64, scratch_operands = 1 : i64, tpu.core_type = #tpu.core_type<tc>, window_params = [{transform_indices = @transform_0, window_bounds = array<i64: 1, 34, 64>}, {pipeline_mode = #tpu.pipeline_mode<synchronous>, transform_indices = @transform_1, window_bounds = array<i64: 3, 64, 128>}, {pipeline_mode = #tpu.pipeline_mode<synchronous>, transform_indices = @transform_2, window_bounds = array<i64: 1, 128>}, {pipeline_mode = #tpu.pipeline_mode<synchronous>, transform_indices = @transform_3, window_bounds = array<i64: 3, 128, 128>}, {pipeline_mode = #tpu.pipeline_mode<synchronous>, transform_indices = @transform_4, window_bounds = array<i64: 1, 128>}, {pipeline_mode = #tpu.pipeline_mode<synchronous>, transform_indices = @transform_5, window_bounds = array<i64: 32, 1>}, {pipeline_mode = #tpu.pipeline_mode<synchronous>, transform_indices = @transform_6, window_bounds = array<i64: 32, 1>}, {pipeline_mode = #tpu.pipeline_mode<synchronous>, transform_indices = @transform_7, window_bounds = array<i64: 16, 32>}, {pipeline_mode = #tpu.pipeline_mode<synchronous>, transform_indices = @transform_8, window_bounds = array<i64: 16, 32>}, {pipeline_mode = #tpu.pipeline_mode<synchronous>, transform_indices = @transform_9, window_bounds = array<i64: 128, 64>}, {pipeline_mode = #tpu.pipeline_mode<synchronous>, transform_indices = @transform_10, window_bounds = array<i64: 128, 64>}, {transform_indices = @transform_11, window_bounds = array<i64: 1, 32, 128>}, {transform_indices = @transform_12, window_bounds = array<i64: 1, 16, 64>}]} {
    %c0 = arith.constant 0 : index
    %c0_0 = arith.constant 0 : index
    %0 = vector.load %arg6[%c0, %c0_0] : memref<32x1xf32, #tpu.memory_space<vmem>>, vector<32x1xf32>
    %c0_1 = arith.constant 0 : index
    %c0_2 = arith.constant 0 : index
    %1 = vector.load %arg7[%c0_1, %c0_2] : memref<32x1xf32, #tpu.memory_space<vmem>>, vector<32x1xf32>
    %c0_3 = arith.constant 0 : index
    %c1 = arith.constant 1 : index
    %c0_4 = arith.constant 0 : index
    %2 = vector.load %arg1[%c0_3, %c1, %c0_4] : memref<1x34x64xf32, #tpu.memory_space<vmem>>, vector<1x32x64xf32>
    %3 = vector.shape_cast %2 : vector<1x32x64xf32> to vector<32x64xf32>
    %c1_5 = arith.constant 1 : index
    %c0_6 = arith.constant 0 : index
    %c0_7 = arith.constant 0 : index
    %4 = vector.load %arg2[%c1_5, %c0_6, %c0_7] : memref<3x64x128xf32, #tpu.memory_space<vmem>>, vector<1x64x128xf32>
    %5 = vector.shape_cast %4 : vector<1x64x128xf32> to vector<64x128xf32>
    %cst = arith.constant dense<0.000000e+00> : vector<32x128xf32>
    %6 = tpu.matmul %3, %5, %cst {dimension_numbers = #tpu.dot_dimension_numbers<[1], [0], [0], [1], [0, 0, 1, 1], [], []>} : vector<32x64xf32>, vector<64x128xf32>, vector<32x128xf32> -> vector<32x128xf32>
    %c0_8 = arith.constant 0 : index
    %c0_9 = arith.constant 0 : index
    %c0_10 = arith.constant 0 : index
    %7 = vector.load %arg1[%c0_8, %c0_9, %c0_10] : memref<1x34x64xf32, #tpu.memory_space<vmem>>, vector<1x32x64xf32>
    %8 = vector.shape_cast %7 : vector<1x32x64xf32> to vector<32x64xf32>
    %c0_11 = arith.constant 0 : index
    %c0_12 = arith.constant 0 : index
    %c0_13 = arith.constant 0 : index
    %9 = vector.load %arg2[%c0_11, %c0_12, %c0_13] : memref<3x64x128xf32, #tpu.memory_space<vmem>>, vector<1x64x128xf32>
    %10 = vector.shape_cast %9 : vector<1x64x128xf32> to vector<64x128xf32>
    %cst_14 = arith.constant dense<0.000000e+00> : vector<32x128xf32>
    %11 = tpu.matmul %8, %10, %cst_14 {dimension_numbers = #tpu.dot_dimension_numbers<[1], [0], [0], [1], [0, 0, 1, 1], [], []>} : vector<32x64xf32>, vector<64x128xf32>, vector<32x128xf32> -> vector<32x128xf32>
    %12 = vector.broadcast %0 : vector<32x1xf32> to vector<32x128xf32>
    %13 = arith.mulf %12, %11 : vector<32x128xf32>
    %14 = arith.addf %6, %13 : vector<32x128xf32>
    %c0_15 = arith.constant 0 : index
    %c2 = arith.constant 2 : index
    %c0_16 = arith.constant 0 : index
    %15 = vector.load %arg1[%c0_15, %c2, %c0_16] : memref<1x34x64xf32, #tpu.memory_space<vmem>>, vector<1x32x64xf32>
    %16 = vector.shape_cast %15 : vector<1x32x64xf32> to vector<32x64xf32>
    %c2_17 = arith.constant 2 : index
    %c0_18 = arith.constant 0 : index
    %c0_19 = arith.constant 0 : index
    %17 = vector.load %arg2[%c2_17, %c0_18, %c0_19] : memref<3x64x128xf32, #tpu.memory_space<vmem>>, vector<1x64x128xf32>
    %18 = vector.shape_cast %17 : vector<1x64x128xf32> to vector<64x128xf32>
    %cst_20 = arith.constant dense<0.000000e+00> : vector<32x128xf32>
    %19 = tpu.matmul %16, %18, %cst_20 {dimension_numbers = #tpu.dot_dimension_numbers<[1], [0], [0], [1], [0, 0, 1, 1], [], []>} : vector<32x64xf32>, vector<64x128xf32>, vector<32x128xf32> -> vector<32x128xf32>
    %20 = vector.broadcast %1 : vector<32x1xf32> to vector<32x128xf32>
    %21 = arith.mulf %20, %19 : vector<32x128xf32>
    %22 = arith.addf %14, %21 : vector<32x128xf32>
    %c0_21 = arith.constant 0 : index
    %c0_22 = arith.constant 0 : index
    %23 = vector.load %arg3[%c0_21, %c0_22] : memref<1x128xf32, #tpu.memory_space<vmem>>, vector<1x128xf32>
    %24 = vector.broadcast %23 : vector<1x128xf32> to vector<32x128xf32>
    %25 = arith.addf %22, %24 : vector<32x128xf32>
    %cst_23 = arith.constant 0.000000e+00 : f32
    %26 = vector.broadcast %cst_23 : f32 to vector<32x128xf32>
    %27 = arith.maximumf %25, %26 : vector<32x128xf32>
    %cst_24 = arith.constant 0.000000e+00 : f32
    %28 = vector.broadcast %cst_24 : f32 to vector<1x128xf32>
    %c0_25 = arith.constant 0 : index
    %c0_26 = arith.constant 0 : index
    %29 = vector.load %arg14[%c0_25, %c0_26] : memref<34x128xf32, #tpu.memory_space<vmem>>, vector<1x128xf32>
    tpu.vector_store %arg14[%c0_25, %c0_26], %28 {strides = array<i32>} : memref<34x128xf32, #tpu.memory_space<vmem>>, vector<1x128xf32>,
    %c33 = arith.constant 33 : index
    %c0_27 = arith.constant 0 : index
    %30 = vector.load %arg14[%c33, %c0_27] : memref<34x128xf32, #tpu.memory_space<vmem>>, vector<1x128xf32>
    tpu.vector_store %arg14[%c33, %c0_27], %28 {strides = array<i32>} : memref<34x128xf32, #tpu.memory_space<vmem>>, vector<1x128xf32>,
    %c1_28 = arith.constant 1 : index
    %c0_29 = arith.constant 0 : index
    %31 = vector.load %arg14[%c1_28, %c0_29] : memref<34x128xf32, #tpu.memory_space<vmem>>, vector<32x128xf32>
    tpu.vector_store %arg14[%c1_28, %c0_29], %27 {strides = array<i32>} : memref<34x128xf32, #tpu.memory_space<vmem>>, vector<32x128xf32>,
    %c1_30 = arith.constant 1 : index
    %c0_31 = arith.constant 0 : index
    %32 = vector.load %arg14[%c1_30, %c0_31] : memref<34x128xf32, #tpu.memory_space<vmem>>, vector<32x128xf32>
    %c1_32 = arith.constant 1 : index
    %c0_33 = arith.constant 0 : index
    %c0_34 = arith.constant 0 : index
    %33 = vector.load %arg4[%c1_32, %c0_33, %c0_34] : memref<3x128x128xf32, #tpu.memory_space<vmem>>, vector<1x128x128xf32>
    %34 = vector.shape_cast %33 : vector<1x128x128xf32> to vector<128x128xf32>
    %cst_35 = arith.constant dense<0.000000e+00> : vector<32x128xf32>
    %35 = tpu.matmul %32, %34, %cst_35 {dimension_numbers = #tpu.dot_dimension_numbers<[1], [0], [0], [1], [0, 0, 1, 1], [], []>} : vector<32x128xf32>, vector<128x128xf32>, vector<32x128xf32> -> vector<32x128xf32>
    %c0_36 = arith.constant 0 : index
    %c0_37 = arith.constant 0 : index
    %36 = vector.load %arg14[%c0_36, %c0_37] : memref<34x128xf32, #tpu.memory_space<vmem>>, vector<32x128xf32>
    %c0_38 = arith.constant 0 : index
    %c0_39 = arith.constant 0 : index
    %c0_40 = arith.constant 0 : index
    %37 = vector.load %arg4[%c0_38, %c0_39, %c0_40] : memref<3x128x128xf32, #tpu.memory_space<vmem>>, vector<1x128x128xf32>
    %38 = vector.shape_cast %37 : vector<1x128x128xf32> to vector<128x128xf32>
    %cst_41 = arith.constant dense<0.000000e+00> : vector<32x128xf32>
    %39 = tpu.matmul %36, %38, %cst_41 {dimension_numbers = #tpu.dot_dimension_numbers<[1], [0], [0], [1], [0, 0, 1, 1], [], []>} : vector<32x128xf32>, vector<128x128xf32>, vector<32x128xf32> -> vector<32x128xf32>
    %40 = vector.broadcast %0 : vector<32x1xf32> to vector<32x128xf32>
    %41 = arith.mulf %40, %39 : vector<32x128xf32>
    %42 = arith.addf %35, %41 : vector<32x128xf32>
    %c2_42 = arith.constant 2 : index
    %c0_43 = arith.constant 0 : index
    %43 = vector.load %arg14[%c2_42, %c0_43] : memref<34x128xf32, #tpu.memory_space<vmem>>, vector<32x128xf32>
    %c2_44 = arith.constant 2 : index
    %c0_45 = arith.constant 0 : index
    %c0_46 = arith.constant 0 : index
    %44 = vector.load %arg4[%c2_44, %c0_45, %c0_46] : memref<3x128x128xf32, #tpu.memory_space<vmem>>, vector<1x128x128xf32>
    %45 = vector.shape_cast %44 : vector<1x128x128xf32> to vector<128x128xf32>
    %cst_47 = arith.constant dense<0.000000e+00> : vector<32x128xf32>
    %46 = tpu.matmul %43, %45, %cst_47 {dimension_numbers = #tpu.dot_dimension_numbers<[1], [0], [0], [1], [0, 0, 1, 1], [], []>} : vector<32x128xf32>, vector<128x128xf32>, vector<32x128xf32> -> vector<32x128xf32>
    %47 = vector.broadcast %1 : vector<32x1xf32> to vector<32x128xf32>
    %48 = arith.mulf %47, %46 : vector<32x128xf32>
    %49 = arith.addf %42, %48 : vector<32x128xf32>
    %c0_48 = arith.constant 0 : index
    %c0_49 = arith.constant 0 : index
    %50 = vector.load %arg5[%c0_48, %c0_49] : memref<1x128xf32, #tpu.memory_space<vmem>>, vector<1x128xf32>
    %51 = vector.broadcast %50 : vector<1x128xf32> to vector<32x128xf32>
    %52 = arith.addf %49, %51 : vector<32x128xf32>
    %cst_50 = arith.constant 0.000000e+00 : f32
    %53 = vector.broadcast %cst_50 : f32 to vector<32x128xf32>
    %54 = arith.maximumf %52, %53 : vector<32x128xf32>
    %55 = vector.shape_cast %54 : vector<32x128xf32> to vector<1x32x128xf32>
    %c0_51 = arith.constant 0 : index
    %c0_52 = arith.constant 0 : index
    %c0_53 = arith.constant 0 : index
    %56 = vector.load %arg12[%c0_51, %c0_52, %c0_53] : memref<1x32x128xf32, #tpu.memory_space<vmem>>, vector<1x32x128xf32>
    tpu.vector_store %arg12[%c0_51, %c0_52, %c0_53], %55 {strides = array<i32>} : memref<1x32x128xf32, #tpu.memory_space<vmem>>, vector<1x32x128xf32>,
    %c0_54 = arith.constant 0 : index
    %c0_55 = arith.constant 0 : index
    %57 = vector.load %arg8[%c0_54, %c0_55] : memref<16x32xf32, #tpu.memory_space<vmem>>, vector<16x32xf32>
    %cst_56 = arith.constant dense<0.000000e+00> : vector<16x128xf32>
    %58 = tpu.matmul %57, %54, %cst_56 {dimension_numbers = #tpu.dot_dimension_numbers<[1], [0], [0], [1], [0, 0, 1, 1], [], []>} : vector<16x32xf32>, vector<32x128xf32>, vector<16x128xf32> -> vector<16x128xf32>
    %c0_57 = arith.constant 0 : index
    %c0_58 = arith.constant 0 : index
    %59 = vector.load %arg9[%c0_57, %c0_58] : memref<16x32xf32, #tpu.memory_space<vmem>>, vector<16x32xf32>
    %cst_59 = arith.constant dense<0.000000e+00> : vector<16x128xf32>
    %60 = tpu.matmul %59, %54, %cst_59 {dimension_numbers = #tpu.dot_dimension_numbers<[1], [0], [0], [1], [0, 0, 1, 1], [], []>} : vector<16x32xf32>, vector<32x128xf32>, vector<16x128xf32> -> vector<16x128xf32>
    %61 = arith.maximumf %58, %60 : vector<16x128xf32>
    %c0_60 = arith.constant 0 : index
    %c0_61 = arith.constant 0 : index
    %62 = vector.load %arg10[%c0_60, %c0_61] : memref<128x64xf32, #tpu.memory_space<vmem>>, vector<128x64xf32>
    %cst_62 = arith.constant dense<0.000000e+00> : vector<16x64xf32>
    %63 = tpu.matmul %61, %62, %cst_62 {dimension_numbers = #tpu.dot_dimension_numbers<[1], [0], [0], [1], [0, 0, 1, 1], [], []>} : vector<16x128xf32>, vector<128x64xf32>, vector<16x64xf32> -> vector<16x64xf32>
    %c0_63 = arith.constant 0 : index
    %c0_64 = arith.constant 0 : index
    %64 = vector.load %arg11[%c0_63, %c0_64] : memref<128x64xf32, #tpu.memory_space<vmem>>, vector<128x64xf32>
    %cst_65 = arith.constant dense<0.000000e+00> : vector<16x64xf32>
    %65 = tpu.matmul %61, %64, %cst_65 {dimension_numbers = #tpu.dot_dimension_numbers<[1], [0], [0], [1], [0, 0, 1, 1], [], []>} : vector<16x128xf32>, vector<128x64xf32>, vector<16x64xf32> -> vector<16x64xf32>
    %66 = arith.maximumf %63, %65 : vector<16x64xf32>
    %67 = vector.shape_cast %66 : vector<16x64xf32> to vector<1x16x64xf32>
    %c0_66 = arith.constant 0 : index
    %c0_67 = arith.constant 0 : index
    %c0_68 = arith.constant 0 : index
    %68 = vector.load %arg13[%c0_66, %c0_67, %c0_68] : memref<1x16x64xf32, #tpu.memory_space<vmem>>, vector<1x16x64xf32>
    tpu.vector_store %arg13[%c0_66, %c0_67, %c0_68], %67 {strides = array<i32>} : memref<1x16x64xf32, #tpu.memory_space<vmem>>, vector<1x16x64xf32>,
    return
  }
  func.func @transform_0(%arg0: i32) -> (i32, i32, i32) {
    %c0_i32 = arith.constant 0 : i32
    %c0_i32_0 = arith.constant 0 : i32
    %c0_i32_1 = arith.constant 0 : i32
    return %arg0, %c0_i32, %c0_i32_0 : i32, i32, i32
  }
  func.func @transform_1(%arg0: i32) -> (i32, i32, i32) {
    %c0_i32 = arith.constant 0 : i32
    %c0_i32_0 = arith.constant 0 : i32
    %c0_i32_1 = arith.constant 0 : i32
    %c0_i32_2 = arith.constant 0 : i32
    return %c0_i32, %c0_i32_0, %c0_i32_1 : i32, i32, i32
  }
  func.func @transform_2(%arg0: i32) -> (i32, i32) {
    %c0_i32 = arith.constant 0 : i32
    %c0_i32_0 = arith.constant 0 : i32
    %c0_i32_1 = arith.constant 0 : i32
    return %c0_i32, %c0_i32_0 : i32, i32
  }
  func.func @transform_3(%arg0: i32) -> (i32, i32, i32) {
    %c0_i32 = arith.constant 0 : i32
    %c0_i32_0 = arith.constant 0 : i32
    %c0_i32_1 = arith.constant 0 : i32
    %c0_i32_2 = arith.constant 0 : i32
    return %c0_i32, %c0_i32_0, %c0_i32_1 : i32, i32, i32
  }
  func.func @transform_4(%arg0: i32) -> (i32, i32) {
    %c0_i32 = arith.constant 0 : i32
    %c0_i32_0 = arith.constant 0 : i32
    %c0_i32_1 = arith.constant 0 : i32
    return %c0_i32, %c0_i32_0 : i32, i32
  }
  func.func @transform_5(%arg0: i32) -> (i32, i32) {
    %c0_i32 = arith.constant 0 : i32
    %c0_i32_0 = arith.constant 0 : i32
    %c0_i32_1 = arith.constant 0 : i32
    return %c0_i32, %c0_i32_0 : i32, i32
  }
  func.func @transform_6(%arg0: i32) -> (i32, i32) {
    %c0_i32 = arith.constant 0 : i32
    %c0_i32_0 = arith.constant 0 : i32
    %c0_i32_1 = arith.constant 0 : i32
    return %c0_i32, %c0_i32_0 : i32, i32
  }
  func.func @transform_7(%arg0: i32) -> (i32, i32) {
    %c0_i32 = arith.constant 0 : i32
    %c0_i32_0 = arith.constant 0 : i32
    %c0_i32_1 = arith.constant 0 : i32
    return %c0_i32, %c0_i32_0 : i32, i32
  }
  func.func @transform_8(%arg0: i32) -> (i32, i32) {
    %c0_i32 = arith.constant 0 : i32
    %c0_i32_0 = arith.constant 0 : i32
    %c0_i32_1 = arith.constant 0 : i32
    return %c0_i32, %c0_i32_0 : i32, i32
  }
  func.func @transform_9(%arg0: i32) -> (i32, i32) {
    %c0_i32 = arith.constant 0 : i32
    %c0_i32_0 = arith.constant 0 : i32
    %c0_i32_1 = arith.constant 0 : i32
    return %c0_i32, %c0_i32_0 : i32, i32
  }
  func.func @transform_10(%arg0: i32) -> (i32, i32) {
    %c0_i32 = arith.constant 0 : i32
    %c0_i32_0 = arith.constant 0 : i32
    %c0_i32_1 = arith.constant 0 : i32
    return %c0_i32, %c0_i32_0 : i32, i32
  }
  func.func @transform_11(%arg0: i32) -> (i32, i32, i32) {
    %c0_i32 = arith.constant 0 : i32
    %c0_i32_0 = arith.constant 0 : i32
    %c0_i32_1 = arith.constant 0 : i32
    return %arg0, %c0_i32, %c0_i32_0 : i32, i32, i32
  }
  func.func @transform_12(%arg0: i32) -> (i32, i32, i32) {
    %c0_i32 = arith.constant 0 : i32
    %c0_i32_0 = arith.constant 0 : i32
    %c0_i32_1 = arith.constant 0 : i32
    return %arg0, %c0_i32, %c0_i32_0 : i32, i32, i32
  }
}

</mosaic_0001>

<llo_original>
// kernel: tile.13
$region0: #{tile.13}
  #allocation0 [shape = 's32[1]{0}', space=sflag, size = 0x4, scoped, tag = 'scoped memory for tile.13']
  %s0 = inlined_call_operand.vmem [shape: f32[8], index: 0, kind: input, shape index: {}]
  %s1 = inlined_call_operand.vmem [shape: f32[16,8], index: 1, kind: output, shape index: {}]
  // Predicated region
  $region2: #{tile.13} parent=0 // pred_check
    _
  $region3: #{tile.13} parent=0 // pred_check_branch
    %3 = sbr.rel (0) target = $region5
  $region4: #{tile.13} parent=0 // pred_region
    _
  $region5: #{tile.13} parent=0 // pred_fallthru
    _
  %v4 = vld [vmem:[%s0] ss:$0 sm:$0xff]
  %5 = vst [vmem:[%s1] sm:$0xff] %v4
  %s6 = scalar_lea.vmem %s1, 8
  %7 = vst [vmem:[%s6] sm:$0xff] %v4

// kernel: tile.14
$region0: #{tile.14}
  %s0 = inlined_call_operand.vmem [shape: f32[16,8], index: 0, kind: input, shape index: {}]
  %s1 = inlined_call_operand.vmem [shape: f32[1,128], index: 1, kind: output, shape index: {}]
  $region1: #{tile.14} parent=0
    #allocation0 [shape = 'u8[4096]{0}', space=vmem, size = 0x1000, scoped, tag = 'scoped mem for output reshape']
    %v2 = vld [vmem:[%s0] sm:$0x1]
    %vm3 = vcmask 64512
    %4 = vst.msk [vmem:[#allocation0] sm:$0x1] %vm3, %v2
    %s5 = scalar_lea.vmem %s0, 15
    %v6 = vld [vmem:[%s5] sm:$0x1]
    %7 = vrot.lane.b32.xlu0 %v6, 120
    %v8 = vpop.permute.xlu0 %7
    %vm9 = vcmask 1048512
    %10 = vst.msk [vmem:[#allocation0] sm:$0x1] %vm9, %v8
    %s11 = scalar_lea.vmem %s0, 14
    %v12 = vld [vmem:[%s11] sm:$0x1]
    %13 = vrot.lane.b32.xlu0 %v12, 112
    %v14 = vpop.permute.xlu0 %13
    %vm15 = vcmask 982912
    %16 = vst.msk [vmem:[#allocation0] sm:$0x1] %vm15, %v14
    %s17 = scalar_lea.vmem %s0, 13
    %v18 = vld [vmem:[%s17] sm:$0x1]
    %19 = vrot.lane.b32.xlu0 %v18, 104
    %v20 = vpop.permute.xlu0 %19
    %vm21 = vcmask 917312
    %22 = vst.msk [vmem:[#allocation0] sm:$0x1] %vm21, %v20
    %s23 = scalar_lea.vmem %s0, 12
    %v24 = vld [vmem:[%s23] sm:$0x1]
    %25 = vrot.lane.b32.xlu0 %v24, 96
    %v26 = vpop.permute.xlu0 %25
    %vm27 = vcmask 851712
    %28 = vst.msk [vmem:[#allocation0] sm:$0x1] %vm27, %v26
    %s29 = scalar_lea.vmem %s0, 11
    %v30 = vld [vmem:[%s29] sm:$0x1]
    %31 = vrot.lane.b32.xlu0 %v30, 88
    %v32 = vpop.permute.xlu0 %31
    %vm33 = vcmask 786112
    %34 = vst.msk [vmem:[#allocation0] sm:$0x1] %vm33, %v32
    %s35 = scalar_lea.vmem %s0, 10
    %v36 = vld [vmem:[%s35] sm:$0x1]
    %37 = vrot.lane.b32.xlu0 %v36, 80
    %v38 = vpop.permute.xlu0 %37
    %vm39 = vcmask 720512
    %40 = vst.msk [vmem:[#allocation0] sm:$0x1] %vm39, %v38
    %s41 = scalar_lea.vmem %s0, 9
    %v42 = vld [vmem:[%s41] sm:$0x1]
    %43 = vrot.lane.b32.xlu0 %v42, 72
    %v44 = vpop.permute.xlu0 %43
    %vm45 = vcmask 654912
    %46 = vst.msk [vmem:[#allocation0] sm:$0x1] %vm45, %v44
    %s47 = scalar_lea.vmem %s0, 8
    %v48 = vld [vmem:[%s47] sm:$0x1]
    %49 = vrot.lane.b32.xlu0 %v48, 64
    %v50 = vpop.permute.xlu0 %49
    %vm51 = vcmask 589312
    %52 = vst.msk [vmem:[#allocation0] sm:$0x1] %vm51, %v50
    %s53 = scalar_lea.vmem %s0, 7
    %v54 = vld [vmem:[%s53] sm:$0x1]
    %55 = vrot.lane.b32.xlu0 %v54, 56
    %v56 = vpop.permute.xlu0 %55
    %vm57 = vcmask 523712
    %58 = vst.msk [vmem:[#allocation0] sm:$0x1] %vm57, %v56
    %s59 = scalar_lea.vmem %s0, 6
    %v60 = vld [vmem:[%s59] sm:$0x1]
    %61 = vrot.lane.b32.xlu0 %v60, 48
    %v62 = vpop.permute.xlu0 %61
    %vm63 = vcmask 458112
    %64 = vst.msk [vmem:[#allocation0] sm:$0x1] %vm63, %v62
    %s65 = scalar_lea.vmem %s0, 5
    %v66 = vld [vmem:[%s65] sm:$0x1]
    %67 = vrot.lane.b32.xlu0 %v66, 40
    %v68 = vpop.permute.xlu0 %67
    %vm69 = vcmask 392512
    %70 = vst.msk [vmem:[#allocation0] sm:$0x1] %vm69, %v68
    %s71 = scalar_lea.vmem %s0, 4
    %v72 = vld [vmem:[%s71] sm:$0x1]
    %73 = vrot.lane.b32.xlu0 %v72, 32
    %v74 = vpop.permute.xlu0 %73
    %vm75 = vcmask 326912
    %76 = vst.msk [vmem:[#allocation0] sm:$0x1] %vm75, %v74
    %s77 = scalar_lea.vmem %s0, 3
    %v78 = vld [vmem:[%s77] sm:$0x1]
    %79 = vrot.lane.b32.xlu0 %v78, 24
    %v80 = vpop.permute.xlu0 %79
    %vm81 = vcmask 261312
    %82 = vst.msk [vmem:[#allocation0] sm:$0x1] %vm81, %v80
    %s83 = scalar_lea.vmem %s0, 2
    %v84 = vld [vmem:[%s83] sm:$0x1]
    %85 = vrot.lane.b32.xlu0 %v84, 16
    %v86 = vpop.permute.xlu0 %85
    %vm87 = vcmask 195712
    %88 = vst.msk [vmem:[#allocation0] sm:$0x1] %vm87, %v86
    %s89 = scalar_lea.vmem %s0, 1
    %v90 = vld [vmem:[%s89] sm:$0x1]
    %91 = vrot.lane.b32.xlu0 %v90, 8
    %v92 = vpop.permute.xlu0 %91
    %vm93 = vcmask 130112
    %94 = vst.msk [vmem:[#allocation0] sm:$0x1] %vm93, %v92
    %s96 = ssub.s32 2, 1
    %v97 = vld [vmem:[#allocation0] sm:%s96]
    %s99 = ssub.s32 2, 1
    %100 = vst [vmem:[%s1] sm:%s99] %v97

// kernel: down_conv_forward.1
$region0: #{down_conv_forward.1}
  #allocation0 [shape = 'u32[]', space=smem, size = 0x4, offset = 0x4, fixed_abs, tag = 'smem constant byte address 0x4 - core index']
  #allocation1 [shape = 'u32[72,128]{1,0:T(1,128)}', space=vmem, size = 0x9000, scoped, tag = 'internal scratch']
  #allocation2 [shape = 'f32[34,128]{1,0:T(8,128)}', space=vmem, size = 0x5000, scoped, tag = 'scratch operand']
  %s0 = inlined_call_operand.vmem [shape: f32[1,34,64], index: 0, kind: input, shape index: {}]
  %s1 = inlined_call_operand.vmem [shape: f32[3,64,128], index: 1, kind: input, shape index: {}]
  %s2 = inlined_call_operand.vmem [shape: f32[1,128], index: 2, kind: input, shape index: {}]
  %s3 = inlined_call_operand.vmem [shape: f32[3,128,128], index: 3, kind: input, shape index: {}]
  %s4 = inlined_call_operand.vmem [shape: f32[1,128], index: 4, kind: input, shape index: {}]
  %s5 = inlined_call_operand.vmem [shape: f32[32,1], index: 5, kind: input, shape index: {}]
  %s6 = inlined_call_operand.vmem [shape: f32[32,1], index: 6, kind: input, shape index: {}]
  %s7 = inlined_call_operand.vmem [shape: f32[16,32], index: 7, kind: input, shape index: {}]
  %s8 = inlined_call_operand.vmem [shape: f32[16,32], index: 8, kind: input, shape index: {}]
  %s9 = inlined_call_operand.vmem [shape: f32[128,64], index: 9, kind: input, shape index: {}]
  %s10 = inlined_call_operand.vmem [shape: f32[128,64], index: 10, kind: input, shape index: {}]
  %s11 = inlined_call_operand.vmem [shape: f32[1,32,128], index: 11, kind: output, shape index: {0}]
  %s12 = inlined_call_operand.vmem [shape: f32[1,16,64], index: 12, kind: output, shape index: {1}]
  %13 = xla_tuple %s11, %s12
  %s14 = sld [smem:[#allocation0]]
  $region62: #{down_conv_forward.1} parent=0
    _
  %s16 = ssub.s32 1, %s14
  %s17 = scalar_select 0, %s16, %s14
  // Predicated region
  $region2: #{down_conv_forward.1} parent=0 // pred_check
    _
  $region3: #{down_conv_forward.1} parent=0 // pred_check_branch
    %19 = sbr.rel (0) target = $region5
  $region4: #{down_conv_forward.1} parent=0 // pred_region
    _
  $region5: #{down_conv_forward.1} parent=0 // pred_fallthru
    _
  // Predicated region
  $region6: #{down_conv_forward.1} parent=0 // pred_check
    _
  $region7: #{down_conv_forward.1} parent=0 // pred_check_branch
    %21 = sbr.rel (0) target = $region9
  $region8: #{down_conv_forward.1} parent=0 // pred_region
    _
  $region9: #{down_conv_forward.1} parent=0 // pred_fallthru
    _
  // Predicated region
  $region10: #{down_conv_forward.1} parent=0 // pred_check
    _
  $region11: #{down_conv_forward.1} parent=0 // pred_check_branch
    %23 = sbr.rel (0) target = $region13
  $region12: #{down_conv_forward.1} parent=0 // pred_region
    _
  $region13: #{down_conv_forward.1} parent=0 // pred_fallthru
    _
  // Predicated region
  $region14: #{down_conv_forward.1} parent=0 // pred_check
    _
  $region15: #{down_conv_forward.1} parent=0 // pred_check_branch
    %25 = sbr.rel (0) target = $region17
  $region16: #{down_conv_forward.1} parent=0 // pred_region
    _
  $region17: #{down_conv_forward.1} parent=0 // pred_fallthru
    _
  // Predicated region
  $region18: #{down_conv_forward.1} parent=0 // pred_check
    _
  $region19: #{down_conv_forward.1} parent=0 // pred_check_branch
    %27 = sbr.rel (0) target = $region21
  $region20: #{down_conv_forward.1} parent=0 // pred_region
    _
  $region21: #{down_conv_forward.1} parent=0 // pred_fallthru
    _
  // Predicated region
  $region22: #{down_conv_forward.1} parent=0 // pred_check
    _
  $region23: #{down_conv_forward.1} parent=0 // pred_check_branch
    %29 = sbr.rel (0) target = $region25
  $region24: #{down_conv_forward.1} parent=0 // pred_region
    _
  $region25: #{down_conv_forward.1} parent=0 // pred_fallthru
    _
  // Predicated region
  $region26: #{down_conv_forward.1} parent=0 // pred_check
    _
  $region27: #{down_conv_forward.1} parent=0 // pred_check_branch
    %31 = sbr.rel (0) target = $region29
  $region28: #{down_conv_forward.1} parent=0 // pred_region
    _
  $region29: #{down_conv_forward.1} parent=0 // pred_fallthru
    _
  // Predicated region
  $region30: #{down_conv_forward.1} parent=0 // pred_check
    _
  $region31: #{down_conv_forward.1} parent=0 // pred_check_branch
    %33 = sbr.rel (0) target = $region33
  $region32: #{down_conv_forward.1} parent=0 // pred_region
    _
  $region33: #{down_conv_forward.1} parent=0 // pred_fallthru
    _
  // Predicated region
  $region34: #{down_conv_forward.1} parent=0 // pred_check
    _
  $region35: #{down_conv_forward.1} parent=0 // pred_check_branch
    %35 = sbr.rel (0) target = $region37
  $region36: #{down_conv_forward.1} parent=0 // pred_region
    _
  $region37: #{down_conv_forward.1} parent=0 // pred_fallthru
    _
  // Predicated region
  $region38: #{down_conv_forward.1} parent=0 // pred_check
    _
  $region39: #{down_conv_forward.1} parent=0 // pred_check_branch
    %37 = sbr.rel (0) target = $region41
  $region40: #{down_conv_forward.1} parent=0 // pred_region
    _
  $region41: #{down_conv_forward.1} parent=0 // pred_fallthru
    _
  // Predicated region
  $region42: #{down_conv_forward.1} parent=0 // pred_check
    _
  $region43: #{down_conv_forward.1} parent=0 // pred_check_branch
    %39 = sbr.rel (0) target = $region45
  $region44: #{down_conv_forward.1} parent=0 // pred_region
    _
  $region45: #{down_conv_forward.1} parent=0 // pred_fallthru
    _
  %v40 = vld [vmem:[%s5] sm:$0xff]
  %v41 = vld [vmem:[%s5 + $0x8] sm:$0xff]
  %v42 = vld [vmem:[%s5 + $0x10] sm:$0xff]
  %v43 = vld [vmem:[%s5 + $0x18] sm:$0xff]
  %v44 = vld [vmem:[%s6] sm:$0xff]
  %v45 = vld [vmem:[%s6 + $0x8] sm:$0xff]
  %v46 = vld [vmem:[%s6 + $0x10] sm:$0xff]
  %v47 = vld [vmem:[%s6 + $0x18] sm:$0xff]
  %v48 = vld [vmem:[%s0 + $0x1] sm:$0xff]
  %v49 = vld [vmem:[%s0 + $0x9] sm:$0xff]
  %v50 = vld [vmem:[%s0 + $0x11] sm:$0xff]
  %v51 = vld [vmem:[%s0 + $0x19] sm:$0xff]
  %s52 = scalar_lea.vmem %s1, 64
  %v53 = vld [vmem:[%s52] sm:$0xff]
  %v54 = vld [vmem:[%s52 + $0x8] sm:$0xff]
  %v55 = vld [vmem:[%s52 + $0x10] sm:$0xff]
  %v56 = vld [vmem:[%s52 + $0x18] sm:$0xff]
  %v57 = vld [vmem:[%s52 + $0x20] sm:$0xff]
  %v58 = vld [vmem:[%s52 + $0x28] sm:$0xff]
  %v59 = vld [vmem:[%s52 + $0x30] sm:$0xff]
  %v60 = vld [vmem:[%s52 + $0x38] sm:$0xff]
  %v61 = vld [vmem:[%s0] sm:$0xff]
  %v62 = vld [vmem:[%s0 + $0x8] sm:$0xff]
  %v63 = vld [vmem:[%s0 + $0x10] sm:$0xff]
  %v64 = vld [vmem:[%s0 + $0x18] sm:$0xff]
  %v65 = vld [vmem:[%s1] sm:$0xff]
  %v66 = vld [vmem:[%s1 + $0x8] sm:$0xff]
  %v67 = vld [vmem:[%s1 + $0x10] sm:$0xff]
  %v68 = vld [vmem:[%s1 + $0x18] sm:$0xff]
  %v69 = vld [vmem:[%s1 + $0x20] sm:$0xff]
  %v70 = vld [vmem:[%s1 + $0x28] sm:$0xff]
  %v71 = vld [vmem:[%s1 + $0x30] sm:$0xff]
  %v72 = vld [vmem:[%s1 + $0x38] sm:$0xff]
  %vm73 = vcmask 523264
  %v75 = vsel %vm73, %v61, 0
  %v78 = vsel %vm73, %v62, 0
  %v81 = vsel %vm73, %v63, 0
  %v84 = vsel %vm73, %v64, 0
  %86 = vmatpush.msra.mxu0 0.0
  %87 = vmatpush.msra.mxu0 0.0
  %88 = vmatpush.msra.mxu0 0.0
  %89 = vmatpush.msra.mxu0 0.0
  %90 = vmatpush.msra.mxu0 0.0
  %91 = vmatpush.msra.mxu0 0.0
  %92 = vmatpush.msra.mxu0 0.0
  %93 = vmatpush.msra.mxu0 0.0
  %94 = vmatpush.msra.mxu0 %v72
  %95 = vmatpush.msra.mxu0 %v71
  %96 = vmatpush.msra.mxu0 %v70
  %97 = vmatpush.msra.mxu0 %v69
  %98 = vmatpush.msra.mxu0 %v68
  %99 = vmatpush.msra.mxu0 %v67
  %100 = vmatpush.msra.mxu0 %v66
  %101 = vmatpush.msra.mxu0 %v65
  %102 = vmatmul.f32.gmra.mxu0 %v75
  %v103 = vpop.f32.mrf.mxu0
  %v104 = vadd.f32 0.0, %v103
  %105 = vmatmul.f32.gmra.mxu0 %v78
  %v106 = vpop.f32.mrf.mxu0
  %v107 = vadd.f32 0.0, %v106
  %108 = vmatmul.f32.gmra.mxu0 %v81
  %v109 = vpop.f32.mrf.mxu0
  %v110 = vadd.f32 0.0, %v109
  %111 = vmatmul.f32.gmra.mxu0 %v84
  %v112 = vpop.f32.mrf.mxu0
  %v113 = vadd.f32 0.0, %v112
  %114 = vdwg.mxu0
  %116 = vset.pattern.permute.xlu0 0
  %117 = vperm.xlu0 %116, %v40
  %v118 = vpop.permute.xlu0 %117
  %121 = vset.pattern.permute.xlu0 0
  %122 = vperm.xlu0 %121, %v41
  %v123 = vpop.permute.xlu0 %122
  %126 = vset.pattern.permute.xlu0 0
  %127 = vperm.xlu0 %126, %v42
  %v128 = vpop.permute.xlu0 %127
  %131 = vset.pattern.permute.xlu0 0
  %132 = vperm.xlu0 %131, %v43
  %v133 = vpop.permute.xlu0 %132
  %v135 = vmul.f32 %v118, %v104
  %v136 = vmul.f32 %v123, %v107
  %v137 = vmul.f32 %v128, %v110
  %v138 = vmul.f32 %v133, %v113
  %v140 = vsel %vm73, %v48, 0
  %v143 = vsel %vm73, %v49, 0
  %v146 = vsel %vm73, %v50, 0
  %v149 = vsel %vm73, %v51, 0
  %151 = vmatpush.msra.mxu0 0.0
  %152 = vmatpush.msra.mxu0 0.0
  %153 = vmatpush.msra.mxu0 0.0
  %154 = vmatpush.msra.mxu0 0.0
  %155 = vmatpush.msra.mxu0 0.0
  %156 = vmatpush.msra.mxu0 0.0
  %157 = vmatpush.msra.mxu0 0.0
  %158 = vmatpush.msra.mxu0 0.0
  %159 = vmatpush.msra.mxu0 %v60
  %160 = vmatpush.msra.mxu0 %v59
  %161 = vmatpush.msra.mxu0 %v58
  %162 = vmatpush.msra.mxu0 %v57
  %163 = vmatpush.msra.mxu0 %v56
  %164 = vmatpush.msra.mxu0 %v55
  %165 = vmatpush.msra.mxu0 %v54
  %166 = vmatpush.msra.mxu0 %v53
  %167 = vmatmul.f32.gmra.mxu0 %v140
  %v168 = vpop.f32.mrf.mxu0
  %v169 = vadd.f32 %v135, %v168
  %170 = vmatmul.f32.gmra.mxu0 %v143
  %v171 = vpop.f32.mrf.mxu0
  %v172 = vadd.f32 %v136, %v171
  %173 = vmatmul.f32.gmra.mxu0 %v146
  %v174 = vpop.f32.mrf.mxu0
  %v175 = vadd.f32 %v137, %v174
  %176 = vmatmul.f32.gmra.mxu0 %v149
  %v177 = vpop.f32.mrf.mxu0
  %v178 = vadd.f32 %v138, %v177
  %179 = vdwg.mxu0
  %v180 = vld [vmem:[%s0 + $0x2] sm:$0xff]
  %v181 = vld [vmem:[%s0 + $0xa] sm:$0xff]
  %v182 = vld [vmem:[%s0 + $0x12] sm:$0xff]
  %v183 = vld [vmem:[%s0 + $0x1a] sm:$0xff]
  %s184 = scalar_lea.vmem %s1, 128
  %v185 = vld [vmem:[%s184] sm:$0xff]
  %v186 = vld [vmem:[%s184 + $0x8] sm:$0xff]
  %v187 = vld [vmem:[%s184 + $0x10] sm:$0xff]
  %v188 = vld [vmem:[%s184 + $0x18] sm:$0xff]
  %v189 = vld [vmem:[%s184 + $0x20] sm:$0xff]
  %v190 = vld [vmem:[%s184 + $0x28] sm:$0xff]
  %v191 = vld [vmem:[%s184 + $0x30] sm:$0xff]
  %v192 = vld [vmem:[%s184 + $0x38] sm:$0xff]
  %v194 = vsel %vm73, %v180, 0
  %v197 = vsel %vm73, %v181, 0
  %v200 = vsel %vm73, %v182, 0
  %v203 = vsel %vm73, %v183, 0
  %205 = vmatpush.msra.mxu0 0.0
  %206 = vmatpush.msra.mxu0 0.0
  %207 = vmatpush.msra.mxu0 0.0
  %208 = vmatpush.msra.mxu0 0.0
  %209 = vmatpush.msra.mxu0 0.0
  %210 = vmatpush.msra.mxu0 0.0
  %211 = vmatpush.msra.mxu0 0.0
  %212 = vmatpush.msra.mxu0 0.0
  %213 = vmatpush.msra.mxu0 %v192
  %214 = vmatpush.msra.mxu0 %v191
  %215 = vmatpush.msra.mxu0 %v190
  %216 = vmatpush.msra.mxu0 %v189
  %217 = vmatpush.msra.mxu0 %v188
  %218 = vmatpush.msra.mxu0 %v187
  %219 = vmatpush.msra.mxu0 %v186
  %220 = vmatpush.msra.mxu0 %v185
  %221 = vmatmul.f32.gmra.mxu0 %v194
  %v222 = vpop.f32.mrf.mxu0
  %v223 = vadd.f32 0.0, %v222
  %224 = vmatmul.f32.gmra.mxu0 %v197
  %v225 = vpop.f32.mrf.mxu0
  %v226 = vadd.f32 0.0, %v225
  %227 = vmatmul.f32.gmra.mxu0 %v200
  %v228 = vpop.f32.mrf.mxu0
  %v229 = vadd.f32 0.0, %v228
  %230 = vmatmul.f32.gmra.mxu0 %v203
  %v231 = vpop.f32.mrf.mxu0
  %v232 = vadd.f32 0.0, %v231
  %233 = vdwg.mxu0
  %235 = vset.pattern.permute.xlu0 0
  %236 = vperm.xlu0 %235, %v44
  %v237 = vpop.permute.xlu0 %236
  %240 = vset.pattern.permute.xlu0 0
  %241 = vperm.xlu0 %240, %v45
  %v242 = vpop.permute.xlu0 %241
  %245 = vset.pattern.permute.xlu0 0
  %246 = vperm.xlu0 %245, %v46
  %v247 = vpop.permute.xlu0 %246
  %250 = vset.pattern.permute.xlu0 0
  %251 = vperm.xlu0 %250, %v47
  %v252 = vpop.permute.xlu0 %251
  %v254 = vmul.f32 %v237, %v223
  %v255 = vmul.f32 %v242, %v226
  %v256 = vmul.f32 %v247, %v229
  %v257 = vmul.f32 %v252, %v232
  %v258 = vadd.f32 %v169, %v254
  %v259 = vadd.f32 %v172, %v255
  %v260 = vadd.f32 %v175, %v256
  %v261 = vadd.f32 %v178, %v257
  %v262 = vld [vmem:[%s2] sm:$0x1]
  %v264 = vperm.slane %v262, 0
  %v266 = vadd.f32 %v258, %v264
  %v267 = vadd.f32 %v259, %v264
  %v268 = vadd.f32 %v260, %v264
  %v269 = vadd.f32 %v261, %v264
  %v270 = vmax.f32 %v266, 0.0
  %v271 = vmax.f32 %v267, 0.0
  %v272 = vmax.f32 %v268, 0.0
  %v273 = vmax.f32 %v269, 0.0
  %274 = vst [vmem:[#allocation2] sm:$0x1] 0.0
  %275 = vst [vmem:[#allocation2 + $0x21] sm:$0x1] 0.0
  %276 = vst [vmem:[#allocation2 + $0x1] sm:$0xff] %v270
  %277 = vst [vmem:[#allocation2 + $0x9] sm:$0xff] %v271
  %278 = vst [vmem:[#allocation2 + $0x11] sm:$0xff] %v272
  %279 = vst [vmem:[#allocation2 + $0x19] sm:$0xff] %v273
  %v280 = vld [vmem:[#allocation2 + $0x1] sm:$0xff]
  %v281 = vld [vmem:[#allocation2 + $0x9] sm:$0xff]
  %v282 = vld [vmem:[#allocation2 + $0x11] sm:$0xff]
  %v283 = vld [vmem:[#allocation2 + $0x19] sm:$0xff]
  %s284 = scalar_lea.vmem %s3, 128
  %v285 = vld [vmem:[%s284] sm:$0xff]
  %v286 = vld [vmem:[%s284 + $0x8] sm:$0xff]
  %v287 = vld [vmem:[%s284 + $0x10] sm:$0xff]
  %v288 = vld [vmem:[%s284 + $0x18] sm:$0xff]
  %v289 = vld [vmem:[%s284 + $0x20] sm:$0xff]
  %v290 = vld [vmem:[%s284 + $0x28] sm:$0xff]
  %v291 = vld [vmem:[%s284 + $0x30] sm:$0xff]
  %v292 = vld [vmem:[%s284 + $0x38] sm:$0xff]
  %v293 = vld [vmem:[%s284 + $0x40] sm:$0xff]
  %v294 = vld [vmem:[%s284 + $0x48] sm:$0xff]
  %v295 = vld [vmem:[%s284 + $0x50] sm:$0xff]
  %v296 = vld [vmem:[%s284 + $0x58] sm:$0xff]
  %v297 = vld [vmem:[%s284 + $0x60] sm:$0xff]
  %v298 = vld [vmem:[%s284 + $0x68] sm:$0xff]
  %v299 = vld [vmem:[%s284 + $0x70] sm:$0xff]
  %v300 = vld [vmem:[%s284 + $0x78] sm:$0xff]
  %v301 = vld [vmem:[#allocation2] sm:$0xff]
  %v302 = vld [vmem:[#allocation2 + $0x8] sm:$0xff]
  %v303 = vld [vmem:[#allocation2 + $0x10] sm:$0xff]
  %v304 = vld [vmem:[#allocation2 + $0x18] sm:$0xff]
  %v305 = vld [vmem:[%s3] sm:$0xff]
  %v306 = vld [vmem:[%s3 + $0x8] sm:$0xff]
  %v307 = vld [vmem:[%s3 + $0x10] sm:$0xff]
  %v308 = vld [vmem:[%s3 + $0x18] sm:$0xff]
  %v309 = vld [vmem:[%s3 + $0x20] sm:$0xff]
  %v310 = vld [vmem:[%s3 + $0x28] sm:$0xff]
  %v311 = vld [vmem:[%s3 + $0x30] sm:$0xff]
  %v312 = vld [vmem:[%s3 + $0x38] sm:$0xff]
  %v313 = vld [vmem:[%s3 + $0x40] sm:$0xff]
  %v314 = vld [vmem:[%s3 + $0x48] sm:$0xff]
  %v315 = vld [vmem:[%s3 + $0x50] sm:$0xff]
  %v316 = vld [vmem:[%s3 + $0x58] sm:$0xff]
  %v317 = vld [vmem:[%s3 + $0x60] sm:$0xff]
  %v318 = vld [vmem:[%s3 + $0x68] sm:$0xff]
  %v319 = vld [vmem:[%s3 + $0x70] sm:$0xff]
  %v320 = vld [vmem:[%s3 + $0x78] sm:$0xff]
  %321 = vmatpush.msra.mxu0 %v320
  %322 = vmatpush.msra.mxu0 %v319
  %323 = vmatpush.msra.mxu0 %v318
  %324 = vmatpush.msra.mxu0 %v317
  %325 = vmatpush.msra.mxu0 %v316
  %326 = vmatpush.msra.mxu0 %v315
  %327 = vmatpush.msra.mxu0 %v314
  %328 = vmatpush.msra.mxu0 %v313
  %329 = vmatpush.msra.mxu0 %v312
  %330 = vmatpush.msra.mxu0 %v311
  %331 = vmatpush.msra.mxu0 %v310
  %332 = vmatpush.msra.mxu0 %v309
  %333 = vmatpush.msra.mxu0 %v308
  %334 = vmatpush.msra.mxu0 %v307
  %335 = vmatpush.msra.mxu0 %v306
  %336 = vmatpush.msra.mxu0 %v305
  %337 = vmatmul.f32.gmra.mxu0 %v301
  %v338 = vpop.f32.mrf.mxu0
  %v339 = vadd.f32 0.0, %v338
  %340 = vmatmul.f32.gmra.mxu0 %v302
  %v341 = vpop.f32.mrf.mxu0
  %v342 = vadd.f32 0.0, %v341
  %343 = vmatmul.f32.gmra.mxu0 %v303
  %v344 = vpop.f32.mrf.mxu0
  %v345 = vadd.f32 0.0, %v344
  %346 = vmatmul.f32.gmra.mxu0 %v304
  %v347 = vpop.f32.mrf.mxu0
  %v348 = vadd.f32 0.0, %v347
  %349 = vdwg.mxu0
  %v350 = vmul.f32 %v118, %v339
  %v351 = vmul.f32 %v123, %v342
  %v352 = vmul.f32 %v128, %v345
  %v353 = vmul.f32 %v133, %v348
  %354 = vmatpush.msra.mxu0 %v300
  %355 = vmatpush.msra.mxu0 %v299
  %356 = vmatpush.msra.mxu0 %v298
  %357 = vmatpush.msra.mxu0 %v297
  %358 = vmatpush.msra.mxu0 %v296
  %359 = vmatpush.msra.mxu0 %v295
  %360 = vmatpush.msra.mxu0 %v294
  %361 = vmatpush.msra.mxu0 %v293
  %362 = vmatpush.msra.mxu0 %v292
  %363 = vmatpush.msra.mxu0 %v291
  %364 = vmatpush.msra.mxu0 %v290
  %365 = vmatpush.msra.mxu0 %v289
  %366 = vmatpush.msra.mxu0 %v288
  %367 = vmatpush.msra.mxu0 %v287
  %368 = vmatpush.msra.mxu0 %v286
  %369 = vmatpush.msra.mxu0 %v285
  %370 = vmatmul.f32.gmra.mxu0 %v280
  %v371 = vpop.f32.mrf.mxu0
  %v372 = vadd.f32 %v350, %v371
  %373 = vmatmul.f32.gmra.mxu0 %v281
  %v374 = vpop.f32.mrf.mxu0
  %v375 = vadd.f32 %v351, %v374
  %376 = vmatmul.f32.gmra.mxu0 %v282
  %v377 = vpop.f32.mrf.mxu0
  %v378 = vadd.f32 %v352, %v377
  %379 = vmatmul.f32.gmra.mxu0 %v283
  %v380 = vpop.f32.mrf.mxu0
  %v381 = vadd.f32 %v353, %v380
  %382 = vdwg.mxu0
  %v383 = vld [vmem:[#allocation2 + $0x2] sm:$0xff]
  %v384 = vld [vmem:[#allocation2 + $0xa] sm:$0xff]
  %v385 = vld [vmem:[#allocation2 + $0x12] sm:$0xff]
  %v386 = vld [vmem:[#allocation2 + $0x1a] sm:$0xff]
  %s387 = scalar_lea.vmem %s3, 256
  %v388 = vld [vmem:[%s387] sm:$0xff]
  %v389 = vld [vmem:[%s387 + $0x8] sm:$0xff]
  %v390 = vld [vmem:[%s387 + $0x10] sm:$0xff]
  %v391 = vld [vmem:[%s387 + $0x18] sm:$0xff]
  %v392 = vld [vmem:[%s387 + $0x20] sm:$0xff]
  %v393 = vld [vmem:[%s387 + $0x28] sm:$0xff]
  %v394 = vld [vmem:[%s387 + $0x30] sm:$0xff]
  %v395 = vld [vmem:[%s387 + $0x38] sm:$0xff]
  %v396 = vld [vmem:[%s387 + $0x40] sm:$0xff]
  %v397 = vld [vmem:[%s387 + $0x48] sm:$0xff]
  %v398 = vld [vmem:[%s387 + $0x50] sm:$0xff]
  %v399 = vld [vmem:[%s387 + $0x58] sm:$0xff]
  %v400 = vld [vmem:[%s387 + $0x60] sm:$0xff]
  %v401 = vld [vmem:[%s387 + $0x68] sm:$0xff]
  %v402 = vld [vmem:[%s387 + $0x70] sm:$0xff]
  %v403 = vld [vmem:[%s387 + $0x78] sm:$0xff]
  %404 = vmatpush.msra.mxu0 %v403
  %405 = vmatpush.msra.mxu0 %v402
  %406 = vmatpush.msra.mxu0 %v401
  %407 = vmatpush.msra.mxu0 %v400
  %408 = vmatpush.msra.mxu0 %v399
  %409 = vmatpush.msra.mxu0 %v398
  %410 = vmatpush.msra.mxu0 %v397
  %411 = vmatpush.msra.mxu0 %v396
  %412 = vmatpush.msra.mxu0 %v395
  %413 = vmatpush.msra.mxu0 %v394
  %414 = vmatpush.msra.mxu0 %v393
  %415 = vmatpush.msra.mxu0 %v392
  %416 = vmatpush.msra.mxu0 %v391
  %417 = vmatpush.msra.mxu0 %v390
  %418 = vmatpush.msra.mxu0 %v389
  %419 = vmatpush.msra.mxu0 %v388
  %420 = vmatmul.f32.gmra.mxu0 %v383
  %v421 = vpop.f32.mrf.mxu0
  %v422 = vadd.f32 0.0, %v421
  %423 = vmatmul.f32.gmra.mxu0 %v384
  %v424 = vpop.f32.mrf.mxu0
  %v425 = vadd.f32 0.0, %v424
  %426 = vmatmul.f32.gmra.mxu0 %v385
  %v427 = vpop.f32.mrf.mxu0
  %v428 = vadd.f32 0.0, %v427
  %429 = vmatmul.f32.gmra.mxu0 %v386
  %v430 = vpop.f32.mrf.mxu0
  %v431 = vadd.f32 0.0, %v430
  %432 = vdwg.mxu0
  %v433 = vmul.f32 %v237, %v422
  %v434 = vmul.f32 %v242, %v425
  %v435 = vmul.f32 %v247, %v428
  %v436 = vmul.f32 %v252, %v431
  %v437 = vadd.f32 %v372, %v433
  %v438 = vadd.f32 %v375, %v434
  %v439 = vadd.f32 %v378, %v435
  %v440 = vadd.f32 %v381, %v436
  %v441 = vld [vmem:[%s4] sm:$0x1]
  %v443 = vperm.slane %v441, 0
  %v445 = vadd.f32 %v437, %v443
  %v446 = vadd.f32 %v438, %v443
  %v447 = vadd.f32 %v439, %v443
  %v448 = vadd.f32 %v440, %v443
  %v449 = vmax.f32 %v445, 0.0
  %v450 = vmax.f32 %v446, 0.0
  %v451 = vmax.f32 %v447, 0.0
  %v452 = vmax.f32 %v448, 0.0
  %453 = vst [vmem:[%s11] sm:$0xff] %v449
  %454 = vst [vmem:[%s11 + $0x8] sm:$0xff] %v450
  %455 = vst [vmem:[%s11 + $0x10] sm:$0xff] %v451
  %456 = vst [vmem:[%s11 + $0x18] sm:$0xff] %v452
  %v457 = vld [vmem:[%s7] sm:$0xff]
  %v458 = vld [vmem:[%s7 + $0x8] sm:$0xff]
  %vm459 = vcmask 261120
  %v461 = vsel %vm459, %v457, 0
  %v464 = vsel %vm459, %v458, 0
  %466 = vmatpush.msra.mxu0 0.0
  %467 = vmatpush.msra.mxu0 0.0
  %468 = vmatpush.msra.mxu0 0.0
  %469 = vmatpush.msra.mxu0 0.0
  %470 = vmatpush.msra.mxu0 0.0
  %471 = vmatpush.msra.mxu0 0.0
  %472 = vmatpush.msra.mxu0 0.0
  %473 = vmatpush.msra.mxu0 0.0
  %474 = vmatpush.msra.mxu0 0.0
  %475 = vmatpush.msra.mxu0 0.0
  %476 = vmatpush.msra.mxu0 0.0
  %477 = vmatpush.msra.mxu0 0.0
  %478 = vmatpush.msra.mxu0 %v452
  %479 = vmatpush.msra.mxu0 %v451
  %480 = vmatpush.msra.mxu0 %v450
  %481 = vmatpush.msra.mxu0 %v449
  %482 = vmatmul.f32.gmra.mxu0 %v461
  %v483 = vpop.f32.mrf.mxu0
  %v484 = vadd.f32 0.0, %v483
  %485 = vmatmul.f32.gmra.mxu0 %v464
  %v486 = vpop.f32.mrf.mxu0
  %v487 = vadd.f32 0.0, %v486
  %488 = vdwg.mxu0
  %v489 = vld [vmem:[%s8] sm:$0xff]
  %v490 = vld [vmem:[%s8 + $0x8] sm:$0xff]
  %v492 = vsel %vm459, %v489, 0
  %v495 = vsel %vm459, %v490, 0
  %497 = vmatpush.msra.mxu0 0.0
  %498 = vmatpush.msra.mxu0 0.0
  %499 = vmatpush.msra.mxu0 0.0
  %500 = vmatpush.msra.mxu0 0.0
  %501 = vmatpush.msra.mxu0 0.0
  %502 = vmatpush.msra.mxu0 0.0
  %503 = vmatpush.msra.mxu0 0.0
  %504 = vmatpush.msra.mxu0 0.0
  %505 = vmatpush.msra.mxu0 0.0
  %506 = vmatpush.msra.mxu0 0.0
  %507 = vmatpush.msra.mxu0 0.0
  %508 = vmatpush.msra.mxu0 0.0
  %509 = vmatpush.msra.mxu0 %v452
  %510 = vmatpush.msra.mxu0 %v451
  %511 = vmatpush.msra.mxu0 %v450
  %512 = vmatpush.msra.mxu0 %v449
  %513 = vmatmul.f32.gmra.mxu0 %v492
  %v514 = vpop.f32.mrf.mxu0
  %v515 = vadd.f32 0.0, %v514
  %516 = vmatmul.f32.gmra.mxu0 %v495
  %v517 = vpop.f32.mrf.mxu0
  %v518 = vadd.f32 0.0, %v517
  %519 = vdwg.mxu0
  %v520 = vmax.f32 %v484, %v515
  %v521 = vmax.f32 %v487, %v518
  %v522 = vld [vmem:[%s9] sm:$0xff]
  %v523 = vld [vmem:[%s9 + $0x8] sm:$0xff]
  %v524 = vld [vmem:[%s9 + $0x10] sm:$0xff]
  %v525 = vld [vmem:[%s9 + $0x18] sm:$0xff]
  %v526 = vld [vmem:[%s9 + $0x20] sm:$0xff]
  %v527 = vld [vmem:[%s9 + $0x28] sm:$0xff]
  %v528 = vld [vmem:[%s9 + $0x30] sm:$0xff]
  %v529 = vld [vmem:[%s9 + $0x38] sm:$0xff]
  %v530 = vld [vmem:[%s9 + $0x40] sm:$0xff]
  %v531 = vld [vmem:[%s9 + $0x48] sm:$0xff]
  %v532 = vld [vmem:[%s9 + $0x50] sm:$0xff]
  %v533 = vld [vmem:[%s9 + $0x58] sm:$0xff]
  %v534 = vld [vmem:[%s9 + $0x60] sm:$0xff]
  %v535 = vld [vmem:[%s9 + $0x68] sm:$0xff]
  %v536 = vld [vmem:[%s9 + $0x70] sm:$0xff]
  %v537 = vld [vmem:[%s9 + $0x78] sm:$0xff]
  %538 = vmatpush.msra.mxu0 %v537
  %539 = vmatpush.msra.mxu0 %v536
  %540 = vmatpush.msra.mxu0 %v535
  %541 = vmatpush.msra.mxu0 %v534
  %542 = vmatpush.msra.mxu0 %v533
  %543 = vmatpush.msra.mxu0 %v532
  %544 = vmatpush.msra.mxu0 %v531
  %545 = vmatpush.msra.mxu0 %v530
  %546 = vmatpush.msra.mxu0 %v529
  %547 = vmatpush.msra.mxu0 %v528
  %548 = vmatpush.msra.mxu0 %v527
  %549 = vmatpush.msra.mxu0 %v526
  %550 = vmatpush.msra.mxu0 %v525
  %551 = vmatpush.msra.mxu0 %v524
  %552 = vmatpush.msra.mxu0 %v523
  %553 = vmatpush.msra.mxu0 %v522
  %554 = vmatmul.f32.gmra.mxu0 %v520
  %v555 = vpop.f32.mrf.mxu0
  %v556 = vadd.f32 0.0, %v555
  %557 = vmatmul.f32.gmra.mxu0 %v521
  %v558 = vpop.f32.mrf.mxu0
  %v559 = vadd.f32 0.0, %v558
  %560 = vdwg.mxu0
  %v561 = vld [vmem:[%s10] sm:$0xff]
  %v562 = vld [vmem:[%s10 + $0x8] sm:$0xff]
  %v563 = vld [vmem:[%s10 + $0x10] sm:$0xff]
  %v564 = vld [vmem:[%s10 + $0x18] sm:$0xff]
  %v565 = vld [vmem:[%s10 + $0x20] sm:$0xff]
  %v566 = vld [vmem:[%s10 + $0x28] sm:$0xff]
  %v567 = vld [vmem:[%s10 + $0x30] sm:$0xff]
  %v568 = vld [vmem:[%s10 + $0x38] sm:$0xff]
  %v569 = vld [vmem:[%s10 + $0x40] sm:$0xff]
  %v570 = vld [vmem:[%s10 + $0x48] sm:$0xff]
  %v571 = vld [vmem:[%s10 + $0x50] sm:$0xff]
  %v572 = vld [vmem:[%s10 + $0x58] sm:$0xff]
  %v573 = vld [vmem:[%s10 + $0x60] sm:$0xff]
  %v574 = vld [vmem:[%s10 + $0x68] sm:$0xff]
  %v575 = vld [vmem:[%s10 + $0x70] sm:$0xff]
  %v576 = vld [vmem:[%s10 + $0x78] sm:$0xff]
  %577 = vmatpush.msra.mxu0 %v576
  %578 = vmatpush.msra.mxu0 %v575
  %579 = vmatpush.msra.mxu0 %v574
  %580 = vmatpush.msra.mxu0 %v573
  %581 = vmatpush.msra.mxu0 %v572
  %582 = vmatpush.msra.mxu0 %v571
  %583 = vmatpush.msra.mxu0 %v570
  %584 = vmatpush.msra.mxu0 %v569
  %585 = vmatpush.msra.mxu0 %v568
  %586 = vmatpush.msra.mxu0 %v567
  %587 = vmatpush.msra.mxu0 %v566
  %588 = vmatpush.msra.mxu0 %v565
  %589 = vmatpush.msra.mxu0 %v564
  %590 = vmatpush.msra.mxu0 %v563
  %591 = vmatpush.msra.mxu0 %v562
  %592 = vmatpush.msra.mxu0 %v561
  %593 = vmatmul.f32.gmra.mxu0 %v520
  %v594 = vpop.f32.mrf.mxu0
  %v595 = vadd.f32 0.0, %v594
  %596 = vmatmul.f32.gmra.mxu0 %v521
  %v597 = vpop.f32.mrf.mxu0
  %v598 = vadd.f32 0.0, %v597
  %599 = vdwg.mxu0
  %v600 = vmax.f32 %v556, %v595
  %v601 = vmax.f32 %v559, %v598
  %602 = vst.msk [vmem:[%s12] sm:$0xff] %vm73, %v600
  %603 = vst.msk [vmem:[%s12 + $0x8] sm:$0xff] %vm73, %v601
  // Predicated region
  $region46: #{down_conv_forward.1} parent=0 // pred_check
    _
  $region47: #{down_conv_forward.1} parent=0 // pred_check_branch
    %605 = sbr.rel (0) target = $region49
  $region48: #{down_conv_forward.1} parent=0 // pred_region
    _
  $region49: #{down_conv_forward.1} parent=0 // pred_fallthru
    _
  // Predicated region
  $region50: #{down_conv_forward.1} parent=0 // pred_check
    _
  $region51: #{down_conv_forward.1} parent=0 // pred_check_branch
    %607 = sbr.rel (0) target = $region53
  $region52: #{down_conv_forward.1} parent=0 // pred_region
    _
  $region53: #{down_conv_forward.1} parent=0 // pred_fallthru
    _
  // Predicated region
  $region54: #{down_conv_forward.1} parent=0 // pred_check
    _
  $region55: #{down_conv_forward.1} parent=0 // pred_check_branch
    %609 = sbr.rel (0) target = $region57
  $region56: #{down_conv_forward.1} parent=0 // pred_region
    _
  $region57: #{down_conv_forward.1} parent=0 // pred_fallthru
    _
  // Predicated region
  $region58: #{down_conv_forward.1} parent=0 // pred_check
    _
  $region59: #{down_conv_forward.1} parent=0 // pred_check_branch
    %611 = sbr.rel (0) target = $region61
  $region60: #{down_conv_forward.1} parent=0 // pred_region
    _
  $region61: #{down_conv_forward.1} parent=0 // pred_fallthru
    _

</llo_original>
